<compile_context>
chip_gen: v7x
topology: tpu7x:2x2x1
jax: 0.10.0
libtpu: 0.0.40
codegen_flags: <defaults>
</compile_context>

<pallas_src>
import functools

import jax
import jax.numpy as jnp
from jax.experimental import pallas as pl
from jax.experimental.pallas import tpu as pltpu


def _orientation_head_kernel(x_ref, w_ref, b_ref, o_ref):
    # x_ref: (bb, K)  w_ref: (K, N)  b_ref: (1, N)  o_ref: (bb, N)
    x = x_ref[...]
    # Cast W to the activation dtype: f32 x -> f32 matmul (default precision, matches the
    # XLA reference); bf16 x -> single-pass bf16 MXU matmul.  Accumulation stays f32.
    y = jnp.dot(x, w_ref[...].astype(x.dtype), preferred_element_type=jnp.float32)
    y = y + b_ref[...]                              # broadcast bias over rows
    # F.normalize(p=2, dim=1): y / max(||y||_2, 1e-12)
    #   == y * rsqrt(max(sum(y^2), 1e-24))   (sqrt is monotone, so the clamp commutes)
    sq = jnp.sum(y * y, axis=1, keepdims=True)
    inv = jax.lax.rsqrt(jnp.maximum(sq, 1e-24))
    o_ref[...] = (y * inv).astype(o_ref.dtype)


def _round_up(v, m):
    return ((v + m - 1) // m) * m


def _num_tensorcores():
    """2 TensorCores per chip on v7x; 1 on v5e/v6e.  Falls back to 1 (safe: just means
    no tile halving, which is still correct and near-optimal)."""
    try:
        kind = jax.devices()[0].device_kind.lower()
    except Exception:
        return 1
    return 2 if ("v7" in kind or "7x" in kind) else 1


def _choose_block_rows(B, K, itemsize, block_b, n_cores):
    b8 = _round_up(max(B, 1), 8)
    # Small-batch fast path: the whole (rounded) batch is tiny -> one grid step, no
    # per-step pipeline overhead beyond the single launch.
    if b8 * K * itemsize <= (2 << 20):
        return min(b8, 1024)
    # Measured HBM efficiency saturates around 1024 rows, and 1024 keeps double-buffered
    # x at ~16 MiB (fits v7x's 64 MiB VMEM with room to spare).
    bb = min(max(8, (block_b // 8) * 8), 1024, b8)
    # v7x only: split across both TensorCores, but only when each half still gets >= 512
    # rows; round the half UP so we never create a third mostly-empty tile.
    if n_cores >= 2 and b8 >= 1024:
        half = _round_up((b8 + 1) // 2, 8)
        bb = min(bb, half)
    return bb


@functools.partial(jax.jit, static_argnames=("block_b",))
def orientation_head(x, w_t, b, *, block_b=1024):
    """x: (B, K), w_t: (K, N), b: (1, N) -> (B, N) with unit-norm rows (p=2, dim=1)."""
    B, K = x.shape
    Kw, N = w_t.shape
    assert K == Kw
    if b.ndim == 1:
        b = b.reshape(1, -1)

    itemsize = jnp.dtype(x.dtype).itemsize
    bb = _choose_block_rows(B, K, itemsize, block_b, _num_tensorcores())
    grid = (pl.cdiv(B, bb),)          # partial last block; Pallas masks OOB output rows

    # Size VMEM to actual need: double-buffered x/W/bias/out tiles + slack.
    x_bytes = bb * K * itemsize
    w_bytes = K * N * jnp.dtype(w_t.dtype).itemsize
    o_bytes = bb * N * itemsize
    vmem_limit = int(min(max(2 * (x_bytes + w_bytes + o_bytes) + (4 << 20),
                             16 << 20), 48 << 20))

    return pl.pallas_call(
        _orientation_head_kernel,
        out_shape=jax.ShapeDtypeStruct((B, N), x.dtype),
        grid_spec=pltpu.PrefetchScalarGridSpec(
            num_scalar_prefetch=0,
            grid=grid,
            in_specs=[
                pl.BlockSpec((bb, K), lambda i: (i, 0)),   # streamed x tile
                pl.BlockSpec((K, N), lambda i: (0, 0)),    # weight, resident across grid
                pl.BlockSpec((1, N), lambda i: (0, 0)),    # bias, resident across grid
            ],
            out_specs=pl.BlockSpec((bb, N), lambda i: (i, 0)),
        ),
        compiler_params=pltpu.CompilerParams(
            dimension_semantics=("parallel",),
            vmem_limit_bytes=vmem_limit,
        ),
    )(x, w_t, b)


def init_orientation_head_params(key, n_inputs, n_outputs):
    """Mirror the PyTorch module init: kaiming_normal_ on fc.weight (fan_in = n_inputs,
    gain = sqrt(2)), bias = 0.  Weight is returned transposed as (K, N)."""
    std = (2.0 / n_inputs) ** 0.5
    w = jax.random.normal(key, (n_outputs, n_inputs), dtype=jnp.float32) * std
    w_t = jnp.transpose(w)                      # (K, N)
    b = jnp.zeros((1, n_outputs), dtype=jnp.float32)
    return w_t, b


if __name__ == "__main__":
    # Module spec: n_inputs=2048, n_outputs=4.
    K, N = 2048, 4
    key = jax.random.PRNGKey(0)
    kw, kx1, kx2, kx3 = jax.random.split(key, 4)

    w_t, b = init_orientation_head_params(kw, n_inputs=K, n_outputs=N)

    def reference(x):
        y = x @ w_t + b
        return y / jnp.maximum(
            jnp.sqrt(jnp.sum(y * y, axis=1, keepdims=True)), 1e-12
        )

    cases = [
        (16, None, kx1),    # small batch  -> single-step fast path
        (10, None, kx2),    # ragged small -> single partial block, no host-side pad
        (270, 128, kx3),    # multi-step grid with a partial last block (270 = 2*128 + 14)
    ]
    for B, blk, kb in cases:
        x = jax.random.normal(kb, (B, K), dtype=jnp.float32)
        if blk is None:
            out = orientation_head(x, w_t, b)
        else:
            out = orientation_head(x, w_t, b, block_b=blk)
        out = jax.block_until_ready(out)
        y_ref = reference(x)
        assert out.shape == (B, N)
        assert jnp.allclose(out, y_ref, atol=1e-5, rtol=1e-5)
        assert jnp.allclose(jnp.linalg.norm(out, axis=1), 1.0, atol=1e-5)

    print("KERNEL_OK")
</pallas_src>

<mosaic_0001>
module attributes {stable_mosaic.version = 11 : i64} {
  func.func @_orientation_head_kernel(%arg0: i32, %arg1: memref<16x2048xf32, #tpu.memory_space<vmem>>, %arg2: memref<2048x4xf32, #tpu.memory_space<vmem>>, %arg3: memref<1x4xf32, #tpu.memory_space<vmem>>, %arg4: memref<16x4xf32, #tpu.memory_space<vmem>>) attributes {dimension_semantics = [#tpu.dimension_semantics<parallel>], iteration_bounds = array<i64: 1>, scalar_prefetch = 0 : i64, scratch_operands = 0 : i64, tpu.core_type = #tpu.core_type<tc>, window_params = [{transform_indices = @transform_0, window_bounds = array<i64: 16, 2048>}, {pipeline_mode = #tpu.pipeline_mode<synchronous>, transform_indices = @transform_1, window_bounds = array<i64: 2048, 4>}, {pipeline_mode = #tpu.pipeline_mode<synchronous>, transform_indices = @transform_2, window_bounds = array<i64: 1, 4>}, {transform_indices = @transform_3, window_bounds = array<i64: 16, 4>}]} {
    %c0 = arith.constant 0 : index
    %c0_0 = arith.constant 0 : index
    %0 = vector.load %arg1[%c0, %c0_0] : memref<16x2048xf32, #tpu.memory_space<vmem>>, vector<16x2048xf32>
    %c0_1 = arith.constant 0 : index
    %c0_2 = arith.constant 0 : index
    %1 = vector.load %arg2[%c0_1, %c0_2] : memref<2048x4xf32, #tpu.memory_space<vmem>>, vector<2048x4xf32>
    %cst = arith.constant dense<0.000000e+00> : vector<16x4xf32>
    %2 = tpu.matmul %0, %1, %cst {dimension_numbers = #tpu.dot_dimension_numbers<[1], [0], [0], [1], [0, 0, 1, 1], [], []>} : vector<16x2048xf32>, vector<2048x4xf32>, vector<16x4xf32> -> vector<16x4xf32>
    %c0_3 = arith.constant 0 : index
    %c0_4 = arith.constant 0 : index
    %3 = vector.load %arg3[%c0_3, %c0_4] : memref<1x4xf32, #tpu.memory_space<vmem>>, vector<1x4xf32>
    %4 = vector.broadcast %3 : vector<1x4xf32> to vector<16x4xf32>
    %5 = arith.addf %2, %4 : vector<16x4xf32>
    %6 = arith.mulf %5, %5 : vector<16x4xf32>
    %cst_5 = arith.constant dense<0.000000e+00> : vector<16xf32>
    %7 = vector.multi_reduction <add>, %6, %cst_5 [1] : vector<16x4xf32> to vector<16xf32>
    %8 = vector.shape_cast %7 : vector<16xf32> to vector<16x1xf32>
    %cst_6 = arith.constant 1.000000e-24 : f32
    %9 = vector.broadcast %cst_6 : f32 to vector<16x1xf32>
    %10 = arith.maximumf %8, %9 : vector<16x1xf32>
    %11 = math.rsqrt %10 : vector<16x1xf32>
    %12 = vector.broadcast %11 : vector<16x1xf32> to vector<16x4xf32>
    %13 = arith.mulf %5, %12 : vector<16x4xf32>
    %c0_7 = arith.constant 0 : index
    %c0_8 = arith.constant 0 : index
    %14 = vector.load %arg4[%c0_7, %c0_8] : memref<16x4xf32, #tpu.memory_space<vmem>>, vector<16x4xf32>
    tpu.vector_store %arg4[%c0_7, %c0_8], %13 {strides = array<i32>} : memref<16x4xf32, #tpu.memory_space<vmem>>, vector<16x4xf32>,
    return
  }
  func.func @transform_0(%arg0: i32) -> (i32, i32) {
    %c0_i32 = arith.constant 0 : i32
    %c0_i32_0 = arith.constant 0 : i32
    return %arg0, %c0_i32 : i32, i32
  }
  func.func @transform_1(%arg0: i32) -> (i32, i32) {
    %c0_i32 = arith.constant 0 : i32
    %c0_i32_0 = arith.constant 0 : i32
    %c0_i32_1 = arith.constant 0 : i32
    return %c0_i32, %c0_i32_0 : i32, i32
  }
  func.func @transform_2(%arg0: i32) -> (i32, i32) {
    %c0_i32 = arith.constant 0 : i32
    %c0_i32_0 = arith.constant 0 : i32
    %c0_i32_1 = arith.constant 0 : i32
    return %c0_i32, %c0_i32_0 : i32, i32
  }
  func.func @transform_3(%arg0: i32) -> (i32, i32) {
    %c0_i32 = arith.constant 0 : i32
    %c0_i32_0 = arith.constant 0 : i32
    return %arg0, %c0_i32 : i32, i32
  }
}

</mosaic_0001>

<llo_original>
// kernel: orientation_head.1
$region0: #{orientation_head.1}
  #allocation0 [shape = 'u32[]', space=smem, size = 0x4, offset = 0x4, fixed_abs, tag = 'smem constant byte address 0x4 - core index']
  #allocation1 [shape = 'u32[144,128]{1,0:T(1,128)}', space=vmem, size = 0x12000, scoped, tag = 'internal scratch']
  %s0 = inlined_call_operand.vmem [shape: f32[16,2048], index: 0, kind: input, shape index: {}]
  %s1 = inlined_call_operand.vmem [shape: f32[2048,4], index: 1, kind: input, shape index: {}]
  %s2 = inlined_call_operand.vmem [shape: f32[1,4], index: 2, kind: input, shape index: {}]
  %s3 = inlined_call_operand.vmem [shape: f32[16,4], index: 3, kind: output, shape index: {}]
  %s4 = sld [smem:[#allocation0]]
  $region22: #{orientation_head.1} parent=0
    _
  %s6 = ssub.s32 1, %s4
  %s7 = scalar_select 0, %s6, %s4
  // Predicated region
  $region2: #{orientation_head.1} parent=0 // pred_check
    _
  $region3: #{orientation_head.1} parent=0 // pred_check_branch
    %9 = sbr.rel (0) target = $region5
  $region4: #{orientation_head.1} parent=0 // pred_region
    _
  $region5: #{orientation_head.1} parent=0 // pred_fallthru
    _
  // Predicated region
  $region6: #{orientation_head.1} parent=0 // pred_check
    _
  $region7: #{orientation_head.1} parent=0 // pred_check_branch
    %11 = sbr.rel (0) target = $region9
  $region8: #{orientation_head.1} parent=0 // pred_region
    _
  $region9: #{orientation_head.1} parent=0 // pred_fallthru
    _
  // Predicated region
  $region10: #{orientation_head.1} parent=0 // pred_check
    _
  $region11: #{orientation_head.1} parent=0 // pred_check_branch
    %13 = sbr.rel (0) target = $region13
  $region12: #{orientation_head.1} parent=0 // pred_region
    _
  $region13: #{orientation_head.1} parent=0 // pred_fallthru
    _
  %v14 = vld [vmem:[%s0] sm:$0xff]
  %v15 = vld [vmem:[%s0 + $0x8] sm:$0xff]
  %v16 = vld [vmem:[%s0 + $0x10] sm:$0xff]
  %v17 = vld [vmem:[%s0 + $0x18] sm:$0xff]
  %v18 = vld [vmem:[%s0 + $0x20] sm:$0xff]
  %v19 = vld [vmem:[%s0 + $0x28] sm:$0xff]
  %v20 = vld [vmem:[%s0 + $0x30] sm:$0xff]
  %v21 = vld [vmem:[%s0 + $0x38] sm:$0xff]
  %v22 = vld [vmem:[%s0 + $0x40] sm:$0xff]
  %v23 = vld [vmem:[%s0 + $0x48] sm:$0xff]
  %v24 = vld [vmem:[%s0 + $0x50] sm:$0xff]
  %v25 = vld [vmem:[%s0 + $0x58] sm:$0xff]
  %v26 = vld [vmem:[%s0 + $0x60] sm:$0xff]
  %v27 = vld [vmem:[%s0 + $0x68] sm:$0xff]
  %v28 = vld [vmem:[%s0 + $0x70] sm:$0xff]
  %v29 = vld [vmem:[%s0 + $0x78] sm:$0xff]
  %v30 = vld [vmem:[%s0 + $0x80] sm:$0xff]
  %v31 = vld [vmem:[%s0 + $0x88] sm:$0xff]
  %v32 = vld [vmem:[%s0 + $0x90] sm:$0xff]
  %v33 = vld [vmem:[%s0 + $0x98] sm:$0xff]
  %v34 = vld [vmem:[%s0 + $0xa0] sm:$0xff]
  %v35 = vld [vmem:[%s0 + $0xa8] sm:$0xff]
  %v36 = vld [vmem:[%s0 + $0xb0] sm:$0xff]
  %v37 = vld [vmem:[%s0 + $0xb8] sm:$0xff]
  %v38 = vld [vmem:[%s0 + $0xc0] sm:$0xff]
  %v39 = vld [vmem:[%s0 + $0xc8] sm:$0xff]
  %v40 = vld [vmem:[%s0 + $0xd0] sm:$0xff]
  %v41 = vld [vmem:[%s0 + $0xd8] sm:$0xff]
  %v42 = vld [vmem:[%s0 + $0xe0] sm:$0xff]
  %v43 = vld [vmem:[%s0 + $0xe8] sm:$0xff]
  %v44 = vld [vmem:[%s0 + $0xf0] sm:$0xff]
  %v45 = vld [vmem:[%s0 + $0xf8] sm:$0xff]
  %v46 = vld [vmem:[%s1] sm:$0xff]
  %v47 = vld [vmem:[%s1 + $0x8] sm:$0xff]
  %v48 = vld [vmem:[%s1 + $0x10] sm:$0xff]
  %v49 = vld [vmem:[%s1 + $0x18] sm:$0xff]
  %v50 = vld [vmem:[%s1 + $0x20] sm:$0xff]
  %v51 = vld [vmem:[%s1 + $0x28] sm:$0xff]
  %v52 = vld [vmem:[%s1 + $0x30] sm:$0xff]
  %v53 = vld [vmem:[%s1 + $0x38] sm:$0xff]
  %v54 = vld [vmem:[%s1 + $0x40] sm:$0xff]
  %v55 = vld [vmem:[%s1 + $0x48] sm:$0xff]
  %v56 = vld [vmem:[%s1 + $0x50] sm:$0xff]
  %v57 = vld [vmem:[%s1 + $0x58] sm:$0xff]
  %v58 = vld [vmem:[%s1 + $0x60] sm:$0xff]
  %v59 = vld [vmem:[%s1 + $0x68] sm:$0xff]
  %v60 = vld [vmem:[%s1 + $0x70] sm:$0xff]
  %v61 = vld [vmem:[%s1 + $0x78] sm:$0xff]
  %v62 = vld [vmem:[%s1 + $0x80] sm:$0xff]
  %v63 = vld [vmem:[%s1 + $0x88] sm:$0xff]
  %v64 = vld [vmem:[%s1 + $0x90] sm:$0xff]
  %v65 = vld [vmem:[%s1 + $0x98] sm:$0xff]
  %v66 = vld [vmem:[%s1 + $0xa0] sm:$0xff]
  %v67 = vld [vmem:[%s1 + $0xa8] sm:$0xff]
  %v68 = vld [vmem:[%s1 + $0xb0] sm:$0xff]
  %v69 = vld [vmem:[%s1 + $0xb8] sm:$0xff]
  %v70 = vld [vmem:[%s1 + $0xc0] sm:$0xff]
  %v71 = vld [vmem:[%s1 + $0xc8] sm:$0xff]
  %v72 = vld [vmem:[%s1 + $0xd0] sm:$0xff]
  %v73 = vld [vmem:[%s1 + $0xd8] sm:$0xff]
  %v74 = vld [vmem:[%s1 + $0xe0] sm:$0xff]
  %v75 = vld [vmem:[%s1 + $0xe8] sm:$0xff]
  %v76 = vld [vmem:[%s1 + $0xf0] sm:$0xff]
  %v77 = vld [vmem:[%s1 + $0xf8] sm:$0xff]
  %v78 = vld [vmem:[%s1 + $0x100] sm:$0xff]
  %v79 = vld [vmem:[%s1 + $0x108] sm:$0xff]
  %v80 = vld [vmem:[%s1 + $0x110] sm:$0xff]
  %v81 = vld [vmem:[%s1 + $0x118] sm:$0xff]
  %v82 = vld [vmem:[%s1 + $0x120] sm:$0xff]
  %v83 = vld [vmem:[%s1 + $0x128] sm:$0xff]
  %v84 = vld [vmem:[%s1 + $0x130] sm:$0xff]
  %v85 = vld [vmem:[%s1 + $0x138] sm:$0xff]
  %v86 = vld [vmem:[%s1 + $0x140] sm:$0xff]
  %v87 = vld [vmem:[%s1 + $0x148] sm:$0xff]
  %v88 = vld [vmem:[%s1 + $0x150] sm:$0xff]
  %v89 = vld [vmem:[%s1 + $0x158] sm:$0xff]
  %v90 = vld [vmem:[%s1 + $0x160] sm:$0xff]
  %v91 = vld [vmem:[%s1 + $0x168] sm:$0xff]
  %v92 = vld [vmem:[%s1 + $0x170] sm:$0xff]
  %v93 = vld [vmem:[%s1 + $0x178] sm:$0xff]
  %v94 = vld [vmem:[%s1 + $0x180] sm:$0xff]
  %v95 = vld [vmem:[%s1 + $0x188] sm:$0xff]
  %v96 = vld [vmem:[%s1 + $0x190] sm:$0xff]
  %v97 = vld [vmem:[%s1 + $0x198] sm:$0xff]
  %v98 = vld [vmem:[%s1 + $0x1a0] sm:$0xff]
  %v99 = vld [vmem:[%s1 + $0x1a8] sm:$0xff]
  %v100 = vld [vmem:[%s1 + $0x1b0] sm:$0xff]
  %v101 = vld [vmem:[%s1 + $0x1b8] sm:$0xff]
  %v102 = vld [vmem:[%s1 + $0x1c0] sm:$0xff]
  %v103 = vld [vmem:[%s1 + $0x1c8] sm:$0xff]
  %v104 = vld [vmem:[%s1 + $0x1d0] sm:$0xff]
  %v105 = vld [vmem:[%s1 + $0x1d8] sm:$0xff]
  %v106 = vld [vmem:[%s1 + $0x1e0] sm:$0xff]
  %v107 = vld [vmem:[%s1 + $0x1e8] sm:$0xff]
  %v108 = vld [vmem:[%s1 + $0x1f0] sm:$0xff]
  %v109 = vld [vmem:[%s1 + $0x1f8] sm:$0xff]
  %v110 = vld [vmem:[%s1 + $0x200] sm:$0xff]
  %v111 = vld [vmem:[%s1 + $0x208] sm:$0xff]
  %v112 = vld [vmem:[%s1 + $0x210] sm:$0xff]
  %v113 = vld [vmem:[%s1 + $0x218] sm:$0xff]
  %v114 = vld [vmem:[%s1 + $0x220] sm:$0xff]
  %v115 = vld [vmem:[%s1 + $0x228] sm:$0xff]
  %v116 = vld [vmem:[%s1 + $0x230] sm:$0xff]
  %v117 = vld [vmem:[%s1 + $0x238] sm:$0xff]
  %v118 = vld [vmem:[%s1 + $0x240] sm:$0xff]
  %v119 = vld [vmem:[%s1 + $0x248] sm:$0xff]
  %v120 = vld [vmem:[%s1 + $0x250] sm:$0xff]
  %v121 = vld [vmem:[%s1 + $0x258] sm:$0xff]
  %v122 = vld [vmem:[%s1 + $0x260] sm:$0xff]
  %v123 = vld [vmem:[%s1 + $0x268] sm:$0xff]
  %v124 = vld [vmem:[%s1 + $0x270] sm:$0xff]
  %v125 = vld [vmem:[%s1 + $0x278] sm:$0xff]
  %v126 = vld [vmem:[%s1 + $0x280] sm:$0xff]
  %v127 = vld [vmem:[%s1 + $0x288] sm:$0xff]
  %v128 = vld [vmem:[%s1 + $0x290] sm:$0xff]
  %v129 = vld [vmem:[%s1 + $0x298] sm:$0xff]
  %v130 = vld [vmem:[%s1 + $0x2a0] sm:$0xff]
  %v131 = vld [vmem:[%s1 + $0x2a8] sm:$0xff]
  %v132 = vld [vmem:[%s1 + $0x2b0] sm:$0xff]
  %v133 = vld [vmem:[%s1 + $0x2b8] sm:$0xff]
  %v134 = vld [vmem:[%s1 + $0x2c0] sm:$0xff]
  %v135 = vld [vmem:[%s1 + $0x2c8] sm:$0xff]
  %v136 = vld [vmem:[%s1 + $0x2d0] sm:$0xff]
  %v137 = vld [vmem:[%s1 + $0x2d8] sm:$0xff]
  %v138 = vld [vmem:[%s1 + $0x2e0] sm:$0xff]
  %v139 = vld [vmem:[%s1 + $0x2e8] sm:$0xff]
  %v140 = vld [vmem:[%s1 + $0x2f0] sm:$0xff]
  %v141 = vld [vmem:[%s1 + $0x2f8] sm:$0xff]
  %v142 = vld [vmem:[%s1 + $0x300] sm:$0xff]
  %v143 = vld [vmem:[%s1 + $0x308] sm:$0xff]
  %v144 = vld [vmem:[%s1 + $0x310] sm:$0xff]
  %v145 = vld [vmem:[%s1 + $0x318] sm:$0xff]
  %v146 = vld [vmem:[%s1 + $0x320] sm:$0xff]
  %v147 = vld [vmem:[%s1 + $0x328] sm:$0xff]
  %v148 = vld [vmem:[%s1 + $0x330] sm:$0xff]
  %v149 = vld [vmem:[%s1 + $0x338] sm:$0xff]
  %v150 = vld [vmem:[%s1 + $0x340] sm:$0xff]
  %v151 = vld [vmem:[%s1 + $0x348] sm:$0xff]
  %v152 = vld [vmem:[%s1 + $0x350] sm:$0xff]
  %v153 = vld [vmem:[%s1 + $0x358] sm:$0xff]
  %v154 = vld [vmem:[%s1 + $0x360] sm:$0xff]
  %v155 = vld [vmem:[%s1 + $0x368] sm:$0xff]
  %v156 = vld [vmem:[%s1 + $0x370] sm:$0xff]
  %v157 = vld [vmem:[%s1 + $0x378] sm:$0xff]
  %v158 = vld [vmem:[%s1 + $0x380] sm:$0xff]
  %v159 = vld [vmem:[%s1 + $0x388] sm:$0xff]
  %v160 = vld [vmem:[%s1 + $0x390] sm:$0xff]
  %v161 = vld [vmem:[%s1 + $0x398] sm:$0xff]
  %v162 = vld [vmem:[%s1 + $0x3a0] sm:$0xff]
  %v163 = vld [vmem:[%s1 + $0x3a8] sm:$0xff]
  %v164 = vld [vmem:[%s1 + $0x3b0] sm:$0xff]
  %v165 = vld [vmem:[%s1 + $0x3b8] sm:$0xff]
  %v166 = vld [vmem:[%s1 + $0x3c0] sm:$0xff]
  %v167 = vld [vmem:[%s1 + $0x3c8] sm:$0xff]
  %v168 = vld [vmem:[%s1 + $0x3d0] sm:$0xff]
  %v169 = vld [vmem:[%s1 + $0x3d8] sm:$0xff]
  %v170 = vld [vmem:[%s1 + $0x3e0] sm:$0xff]
  %v171 = vld [vmem:[%s1 + $0x3e8] sm:$0xff]
  %v172 = vld [vmem:[%s1 + $0x3f0] sm:$0xff]
  %v173 = vld [vmem:[%s1 + $0x3f8] sm:$0xff]
  %v174 = vld [vmem:[%s1 + $0x400] sm:$0xff]
  %v175 = vld [vmem:[%s1 + $0x408] sm:$0xff]
  %v176 = vld [vmem:[%s1 + $0x410] sm:$0xff]
  %v177 = vld [vmem:[%s1 + $0x418] sm:$0xff]
  %v178 = vld [vmem:[%s1 + $0x420] sm:$0xff]
  %v179 = vld [vmem:[%s1 + $0x428] sm:$0xff]
  %v180 = vld [vmem:[%s1 + $0x430] sm:$0xff]
  %v181 = vld [vmem:[%s1 + $0x438] sm:$0xff]
  %v182 = vld [vmem:[%s1 + $0x440] sm:$0xff]
  %v183 = vld [vmem:[%s1 + $0x448] sm:$0xff]
  %v184 = vld [vmem:[%s1 + $0x450] sm:$0xff]
  %v185 = vld [vmem:[%s1 + $0x458] sm:$0xff]
  %v186 = vld [vmem:[%s1 + $0x460] sm:$0xff]
  %v187 = vld [vmem:[%s1 + $0x468] sm:$0xff]
  %v188 = vld [vmem:[%s1 + $0x470] sm:$0xff]
  %v189 = vld [vmem:[%s1 + $0x478] sm:$0xff]
  %v190 = vld [vmem:[%s1 + $0x480] sm:$0xff]
  %v191 = vld [vmem:[%s1 + $0x488] sm:$0xff]
  %v192 = vld [vmem:[%s1 + $0x490] sm:$0xff]
  %v193 = vld [vmem:[%s1 + $0x498] sm:$0xff]
  %v194 = vld [vmem:[%s1 + $0x4a0] sm:$0xff]
  %v195 = vld [vmem:[%s1 + $0x4a8] sm:$0xff]
  %v196 = vld [vmem:[%s1 + $0x4b0] sm:$0xff]
  %v197 = vld [vmem:[%s1 + $0x4b8] sm:$0xff]
  %v198 = vld [vmem:[%s1 + $0x4c0] sm:$0xff]
  %v199 = vld [vmem:[%s1 + $0x4c8] sm:$0xff]
  %v200 = vld [vmem:[%s1 + $0x4d0] sm:$0xff]
  %v201 = vld [vmem:[%s1 + $0x4d8] sm:$0xff]
  %v202 = vld [vmem:[%s1 + $0x4e0] sm:$0xff]
  %v203 = vld [vmem:[%s1 + $0x4e8] sm:$0xff]
  %v204 = vld [vmem:[%s1 + $0x4f0] sm:$0xff]
  %v205 = vld [vmem:[%s1 + $0x4f8] sm:$0xff]
  %v206 = vld [vmem:[%s1 + $0x500] sm:$0xff]
  %v207 = vld [vmem:[%s1 + $0x508] sm:$0xff]
  %v208 = vld [vmem:[%s1 + $0x510] sm:$0xff]
  %v209 = vld [vmem:[%s1 + $0x518] sm:$0xff]
  %v210 = vld [vmem:[%s1 + $0x520] sm:$0xff]
  %v211 = vld [vmem:[%s1 + $0x528] sm:$0xff]
  %v212 = vld [vmem:[%s1 + $0x530] sm:$0xff]
  %v213 = vld [vmem:[%s1 + $0x538] sm:$0xff]
  %v214 = vld [vmem:[%s1 + $0x540] sm:$0xff]
  %v215 = vld [vmem:[%s1 + $0x548] sm:$0xff]
  %v216 = vld [vmem:[%s1 + $0x550] sm:$0xff]
  %v217 = vld [vmem:[%s1 + $0x558] sm:$0xff]
  %v218 = vld [vmem:[%s1 + $0x560] sm:$0xff]
  %v219 = vld [vmem:[%s1 + $0x568] sm:$0xff]
  %v220 = vld [vmem:[%s1 + $0x570] sm:$0xff]
  %v221 = vld [vmem:[%s1 + $0x578] sm:$0xff]
  %v222 = vld [vmem:[%s1 + $0x580] sm:$0xff]
  %v223 = vld [vmem:[%s1 + $0x588] sm:$0xff]
  %v224 = vld [vmem:[%s1 + $0x590] sm:$0xff]
  %v225 = vld [vmem:[%s1 + $0x598] sm:$0xff]
  %v226 = vld [vmem:[%s1 + $0x5a0] sm:$0xff]
  %v227 = vld [vmem:[%s1 + $0x5a8] sm:$0xff]
  %v228 = vld [vmem:[%s1 + $0x5b0] sm:$0xff]
  %v229 = vld [vmem:[%s1 + $0x5b8] sm:$0xff]
  %v230 = vld [vmem:[%s1 + $0x5c0] sm:$0xff]
  %v231 = vld [vmem:[%s1 + $0x5c8] sm:$0xff]
  %v232 = vld [vmem:[%s1 + $0x5d0] sm:$0xff]
  %v233 = vld [vmem:[%s1 + $0x5d8] sm:$0xff]
  %v234 = vld [vmem:[%s1 + $0x5e0] sm:$0xff]
  %v235 = vld [vmem:[%s1 + $0x5e8] sm:$0xff]
  %v236 = vld [vmem:[%s1 + $0x5f0] sm:$0xff]
  %v237 = vld [vmem:[%s1 + $0x5f8] sm:$0xff]
  %v238 = vld [vmem:[%s1 + $0x600] sm:$0xff]
  %v239 = vld [vmem:[%s1 + $0x608] sm:$0xff]
  %v240 = vld [vmem:[%s1 + $0x610] sm:$0xff]
  %v241 = vld [vmem:[%s1 + $0x618] sm:$0xff]
  %v242 = vld [vmem:[%s1 + $0x620] sm:$0xff]
  %v243 = vld [vmem:[%s1 + $0x628] sm:$0xff]
  %v244 = vld [vmem:[%s1 + $0x630] sm:$0xff]
  %v245 = vld [vmem:[%s1 + $0x638] sm:$0xff]
  %v246 = vld [vmem:[%s1 + $0x640] sm:$0xff]
  %v247 = vld [vmem:[%s1 + $0x648] sm:$0xff]
  %v248 = vld [vmem:[%s1 + $0x650] sm:$0xff]
  %v249 = vld [vmem:[%s1 + $0x658] sm:$0xff]
  %v250 = vld [vmem:[%s1 + $0x660] sm:$0xff]
  %v251 = vld [vmem:[%s1 + $0x668] sm:$0xff]
  %v252 = vld [vmem:[%s1 + $0x670] sm:$0xff]
  %v253 = vld [vmem:[%s1 + $0x678] sm:$0xff]
  %v254 = vld [vmem:[%s1 + $0x680] sm:$0xff]
  %v255 = vld [vmem:[%s1 + $0x688] sm:$0xff]
  %v256 = vld [vmem:[%s1 + $0x690] sm:$0xff]
  %v257 = vld [vmem:[%s1 + $0x698] sm:$0xff]
  %v258 = vld [vmem:[%s1 + $0x6a0] sm:$0xff]
  %v259 = vld [vmem:[%s1 + $0x6a8] sm:$0xff]
  %v260 = vld [vmem:[%s1 + $0x6b0] sm:$0xff]
  %v261 = vld [vmem:[%s1 + $0x6b8] sm:$0xff]
  %v262 = vld [vmem:[%s1 + $0x6c0] sm:$0xff]
  %v263 = vld [vmem:[%s1 + $0x6c8] sm:$0xff]
  %v264 = vld [vmem:[%s1 + $0x6d0] sm:$0xff]
  %v265 = vld [vmem:[%s1 + $0x6d8] sm:$0xff]
  %v266 = vld [vmem:[%s1 + $0x6e0] sm:$0xff]
  %v267 = vld [vmem:[%s1 + $0x6e8] sm:$0xff]
  %v268 = vld [vmem:[%s1 + $0x6f0] sm:$0xff]
  %v269 = vld [vmem:[%s1 + $0x6f8] sm:$0xff]
  %v270 = vld [vmem:[%s1 + $0x700] sm:$0xff]
  %v271 = vld [vmem:[%s1 + $0x708] sm:$0xff]
  %v272 = vld [vmem:[%s1 + $0x710] sm:$0xff]
  %v273 = vld [vmem:[%s1 + $0x718] sm:$0xff]
  %v274 = vld [vmem:[%s1 + $0x720] sm:$0xff]
  %v275 = vld [vmem:[%s1 + $0x728] sm:$0xff]
  %v276 = vld [vmem:[%s1 + $0x730] sm:$0xff]
  %v277 = vld [vmem:[%s1 + $0x738] sm:$0xff]
  %v278 = vld [vmem:[%s1 + $0x740] sm:$0xff]
  %v279 = vld [vmem:[%s1 + $0x748] sm:$0xff]
  %v280 = vld [vmem:[%s1 + $0x750] sm:$0xff]
  %v281 = vld [vmem:[%s1 + $0x758] sm:$0xff]
  %v282 = vld [vmem:[%s1 + $0x760] sm:$0xff]
  %v283 = vld [vmem:[%s1 + $0x768] sm:$0xff]
  %v284 = vld [vmem:[%s1 + $0x770] sm:$0xff]
  %v285 = vld [vmem:[%s1 + $0x778] sm:$0xff]
  %v286 = vld [vmem:[%s1 + $0x780] sm:$0xff]
  %v287 = vld [vmem:[%s1 + $0x788] sm:$0xff]
  %v288 = vld [vmem:[%s1 + $0x790] sm:$0xff]
  %v289 = vld [vmem:[%s1 + $0x798] sm:$0xff]
  %v290 = vld [vmem:[%s1 + $0x7a0] sm:$0xff]
  %v291 = vld [vmem:[%s1 + $0x7a8] sm:$0xff]
  %v292 = vld [vmem:[%s1 + $0x7b0] sm:$0xff]
  %v293 = vld [vmem:[%s1 + $0x7b8] sm:$0xff]
  %v294 = vld [vmem:[%s1 + $0x7c0] sm:$0xff]
  %v295 = vld [vmem:[%s1 + $0x7c8] sm:$0xff]
  %v296 = vld [vmem:[%s1 + $0x7d0] sm:$0xff]
  %v297 = vld [vmem:[%s1 + $0x7d8] sm:$0xff]
  %v298 = vld [vmem:[%s1 + $0x7e0] sm:$0xff]
  %v299 = vld [vmem:[%s1 + $0x7e8] sm:$0xff]
  %v300 = vld [vmem:[%s1 + $0x7f0] sm:$0xff]
  %v301 = vld [vmem:[%s1 + $0x7f8] sm:$0xff]
  %v302 = vld [vmem:[%s2] sm:$0x1]
  %v304 = vlaneseq
  %v305 = vshrl.u32 %v304, 7
  %v306 = vsub.s32 0, %v305
  %v307 = vrot.slane %v302, %v306
  %309 = vmatprep.subr.mxu0 0.0
  %310 = vmatpush1.msra.mxu0 %v46
  %311 = vmatprep.subr.mxu0 0.0
  %312 = vmatpush1.msra.mxu0 %v47
  %313 = vmatprep.subr.mxu0 0.0
  %314 = vmatpush1.msra.mxu0 %v48
  %315 = vmatprep.subr.mxu0 0.0
  %316 = vmatpush1.msra.mxu0 %v49
  %317 = vmatprep.subr.mxu0 0.0
  %318 = vmatpush1.msra.mxu0 %v50
  %319 = vmatprep.subr.mxu0 0.0
  %320 = vmatpush1.msra.mxu0 %v51
  %321 = vmatprep.subr.mxu0 0.0
  %322 = vmatpush1.msra.mxu0 %v52
  %323 = vmatprep.subr.mxu0 0.0
  %324 = vmatpush1.msra.mxu0 %v53
  %325 = vmatprep.subr.mxu0 0.0
  %326 = vmatpush1.msra.mxu0 %v54
  %327 = vmatprep.subr.mxu0 0.0
  %328 = vmatpush1.msra.mxu0 %v55
  %329 = vmatprep.subr.mxu0 0.0
  %330 = vmatpush1.msra.mxu0 %v56
  %331 = vmatprep.subr.mxu0 0.0
  %332 = vmatpush1.msra.mxu0 %v57
  %333 = vmatprep.subr.mxu0 0.0
  %334 = vmatpush1.msra.mxu0 %v58
  %335 = vmatprep.subr.mxu0 0.0
  %336 = vmatpush1.msra.mxu0 %v59
  %337 = vmatprep.subr.mxu0 0.0
  %338 = vmatpush1.msra.mxu0 %v60
  %339 = vmatprep.subr.mxu0 0.0
  %340 = vmatpush1.msra.mxu0 %v61
  %341 = vmatprep.subr.mxu0 0.0
  %342 = vmatpush1.msra.mxu0 %v62
  %343 = vmatprep.subr.mxu0 0.0
  %344 = vmatpush1.msra.mxu0 %v63
  %345 = vmatprep.subr.mxu0 0.0
  %346 = vmatpush1.msra.mxu0 %v64
  %347 = vmatprep.subr.mxu0 0.0
  %348 = vmatpush1.msra.mxu0 %v65
  %349 = vmatprep.subr.mxu0 0.0
  %350 = vmatpush1.msra.mxu0 %v66
  %351 = vmatprep.subr.mxu0 0.0
  %352 = vmatpush1.msra.mxu0 %v67
  %353 = vmatprep.subr.mxu0 0.0
  %354 = vmatpush1.msra.mxu0 %v68
  %355 = vmatprep.subr.mxu0 0.0
  %356 = vmatpush1.msra.mxu0 %v69
  %357 = vmatprep.subr.mxu0 0.0
  %358 = vmatpush1.msra.mxu0 %v70
  %359 = vmatprep.subr.mxu0 0.0
  %360 = vmatpush1.msra.mxu0 %v71
  %361 = vmatprep.subr.mxu0 0.0
  %362 = vmatpush1.msra.mxu0 %v72
  %363 = vmatprep.subr.mxu0 0.0
  %364 = vmatpush1.msra.mxu0 %v73
  %365 = vmatprep.subr.mxu0 0.0
  %366 = vmatpush1.msra.mxu0 %v74
  %367 = vmatprep.subr.mxu0 0.0
  %368 = vmatpush1.msra.mxu0 %v75
  %369 = vmatprep.subr.mxu0 0.0
  %370 = vmatpush1.msra.mxu0 %v76
  %371 = vmatprep.subr.mxu0 0.0
  %372 = vmatpush1.msra.mxu0 %v77
  %373 = vmatprep.mubr.f32.mxu0 %v15
  %374 = vmatmul.mubr.f32.gmra.mrb[0].mxu0 %v14
  %v375 = vpop.f32.mrb[0].mxu0
  %v376 = vadd.f32 %v307, %v375
  %v377 = vpop.f32.mrb[0].mxu0
  %378 = vmatprep.mubr.f32.mxu0 %v31
  %379 = vmatmul.mubr.f32.gmra.mrb[0].mxu0 %v30
  %v380 = vpop.f32.mrb[0].mxu0
  %v381 = vadd.f32 %v307, %v380
  %v382 = vpop.f32.mrb[0].mxu0
  %383 = vdwg.mxu0
  %384 = vmatprep.subr.mxu0 0.0
  %385 = vmatpush1.msra.mxu0 %v78
  %386 = vmatprep.subr.mxu0 0.0
  %387 = vmatpush1.msra.mxu0 %v79
  %388 = vmatprep.subr.mxu0 0.0
  %389 = vmatpush1.msra.mxu0 %v80
  %390 = vmatprep.subr.mxu0 0.0
  %391 = vmatpush1.msra.mxu0 %v81
  %392 = vmatprep.subr.mxu0 0.0
  %393 = vmatpush1.msra.mxu0 %v82
  %394 = vmatprep.subr.mxu0 0.0
  %395 = vmatpush1.msra.mxu0 %v83
  %396 = vmatprep.subr.mxu0 0.0
  %397 = vmatpush1.msra.mxu0 %v84
  %398 = vmatprep.subr.mxu0 0.0
  %399 = vmatpush1.msra.mxu0 %v85
  %400 = vmatprep.subr.mxu0 0.0
  %401 = vmatpush1.msra.mxu0 %v86
  %402 = vmatprep.subr.mxu0 0.0
  %403 = vmatpush1.msra.mxu0 %v87
  %404 = vmatprep.subr.mxu0 0.0
  %405 = vmatpush1.msra.mxu0 %v88
  %406 = vmatprep.subr.mxu0 0.0
  %407 = vmatpush1.msra.mxu0 %v89
  %408 = vmatprep.subr.mxu0 0.0
  %409 = vmatpush1.msra.mxu0 %v90
  %410 = vmatprep.subr.mxu0 0.0
  %411 = vmatpush1.msra.mxu0 %v91
  %412 = vmatprep.subr.mxu0 0.0
  %413 = vmatpush1.msra.mxu0 %v92
  %414 = vmatprep.subr.mxu0 0.0
  %415 = vmatpush1.msra.mxu0 %v93
  %416 = vmatprep.subr.mxu0 0.0
  %417 = vmatpush1.msra.mxu0 %v94
  %418 = vmatprep.subr.mxu0 0.0
  %419 = vmatpush1.msra.mxu0 %v95
  %420 = vmatprep.subr.mxu0 0.0
  %421 = vmatpush1.msra.mxu0 %v96
  %422 = vmatprep.subr.mxu0 0.0
  %423 = vmatpush1.msra.mxu0 %v97
  %424 = vmatprep.subr.mxu0 0.0
  %425 = vmatpush1.msra.mxu0 %v98
  %426 = vmatprep.subr.mxu0 0.0
  %427 = vmatpush1.msra.mxu0 %v99
  %428 = vmatprep.subr.mxu0 0.0
  %429 = vmatpush1.msra.mxu0 %v100
  %430 = vmatprep.subr.mxu0 0.0
  %431 = vmatpush1.msra.mxu0 %v101
  %432 = vmatprep.subr.mxu0 0.0
  %433 = vmatpush1.msra.mxu0 %v102
  %434 = vmatprep.subr.mxu0 0.0
  %435 = vmatpush1.msra.mxu0 %v103
  %436 = vmatprep.subr.mxu0 0.0
  %437 = vmatpush1.msra.mxu0 %v104
  %438 = vmatprep.subr.mxu0 0.0
  %439 = vmatpush1.msra.mxu0 %v105
  %440 = vmatprep.subr.mxu0 0.0
  %441 = vmatpush1.msra.mxu0 %v106
  %442 = vmatprep.subr.mxu0 0.0
  %443 = vmatpush1.msra.mxu0 %v107
  %444 = vmatprep.subr.mxu0 0.0
  %445 = vmatpush1.msra.mxu0 %v108
  %446 = vmatprep.subr.mxu0 0.0
  %447 = vmatpush1.msra.mxu0 %v109
  %448 = vmatprep.mubr.f32.mxu0 %v17
  %449 = vmatmul.mubr.f32.gmra.mrb[0].mxu0 %v16
  %v450 = vpop.f32.mrb[0].mxu0
  %v451 = vadd.f32 %v376, %v450
  %v452 = vpop.f32.mrb[0].mxu0
  %453 = vmatprep.mubr.f32.mxu0 %v33
  %454 = vmatmul.mubr.f32.gmra.mrb[0].mxu0 %v32
  %v455 = vpop.f32.mrb[0].mxu0
  %v456 = vadd.f32 %v381, %v455
  %v457 = vpop.f32.mrb[0].mxu0
  %458 = vdwg.mxu0
  %459 = vmatprep.subr.mxu0 0.0
  %460 = vmatpush1.msra.mxu0 %v110
  %461 = vmatprep.subr.mxu0 0.0
  %462 = vmatpush1.msra.mxu0 %v111
  %463 = vmatprep.subr.mxu0 0.0
  %464 = vmatpush1.msra.mxu0 %v112
  %465 = vmatprep.subr.mxu0 0.0
  %466 = vmatpush1.msra.mxu0 %v113
  %467 = vmatprep.subr.mxu0 0.0
  %468 = vmatpush1.msra.mxu0 %v114
  %469 = vmatprep.subr.mxu0 0.0
  %470 = vmatpush1.msra.mxu0 %v115
  %471 = vmatprep.subr.mxu0 0.0
  %472 = vmatpush1.msra.mxu0 %v116
  %473 = vmatprep.subr.mxu0 0.0
  %474 = vmatpush1.msra.mxu0 %v117
  %475 = vmatprep.subr.mxu0 0.0
  %476 = vmatpush1.msra.mxu0 %v118
  %477 = vmatprep.subr.mxu0 0.0
  %478 = vmatpush1.msra.mxu0 %v119
  %479 = vmatprep.subr.mxu0 0.0
  %480 = vmatpush1.msra.mxu0 %v120
  %481 = vmatprep.subr.mxu0 0.0
  %482 = vmatpush1.msra.mxu0 %v121
  %483 = vmatprep.subr.mxu0 0.0
  %484 = vmatpush1.msra.mxu0 %v122
  %485 = vmatprep.subr.mxu0 0.0
  %486 = vmatpush1.msra.mxu0 %v123
  %487 = vmatprep.subr.mxu0 0.0
  %488 = vmatpush1.msra.mxu0 %v124
  %489 = vmatprep.subr.mxu0 0.0
  %490 = vmatpush1.msra.mxu0 %v125
  %491 = vmatprep.subr.mxu0 0.0
  %492 = vmatpush1.msra.mxu0 %v126
  %493 = vmatprep.subr.mxu0 0.0
  %494 = vmatpush1.msra.mxu0 %v127
  %495 = vmatprep.subr.mxu0 0.0
  %496 = vmatpush1.msra.mxu0 %v128
  %497 = vmatprep.subr.mxu0 0.0
  %498 = vmatpush1.msra.mxu0 %v129
  %499 = vmatprep.subr.mxu0 0.0
  %500 = vmatpush1.msra.mxu0 %v130
  %501 = vmatprep.subr.mxu0 0.0
  %502 = vmatpush1.msra.mxu0 %v131
  %503 = vmatprep.subr.mxu0 0.0
  %504 = vmatpush1.msra.mxu0 %v132
  %505 = vmatprep.subr.mxu0 0.0
  %506 = vmatpush1.msra.mxu0 %v133
  %507 = vmatprep.subr.mxu0 0.0
  %508 = vmatpush1.msra.mxu0 %v134
  %509 = vmatprep.subr.mxu0 0.0
  %510 = vmatpush1.msra.mxu0 %v135
  %511 = vmatprep.subr.mxu0 0.0
  %512 = vmatpush1.msra.mxu0 %v136
  %513 = vmatprep.subr.mxu0 0.0
  %514 = vmatpush1.msra.mxu0 %v137
  %515 = vmatprep.subr.mxu0 0.0
  %516 = vmatpush1.msra.mxu0 %v138
  %517 = vmatprep.subr.mxu0 0.0
  %518 = vmatpush1.msra.mxu0 %v139
  %519 = vmatprep.subr.mxu0 0.0
  %520 = vmatpush1.msra.mxu0 %v140
  %521 = vmatprep.subr.mxu0 0.0
  %522 = vmatpush1.msra.mxu0 %v141
  %523 = vmatprep.mubr.f32.mxu0 %v19
  %524 = vmatmul.mubr.f32.gmra.mrb[0].mxu0 %v18
  %v525 = vpop.f32.mrb[0].mxu0
  %v526 = vadd.f32 %v451, %v525
  %v527 = vpop.f32.mrb[0].mxu0
  %528 = vmatprep.mubr.f32.mxu0 %v35
  %529 = vmatmul.mubr.f32.gmra.mrb[0].mxu0 %v34
  %v530 = vpop.f32.mrb[0].mxu0
  %v531 = vadd.f32 %v456, %v530
  %v532 = vpop.f32.mrb[0].mxu0
  %533 = vdwg.mxu0
  %534 = vmatprep.subr.mxu0 0.0
  %535 = vmatpush1.msra.mxu0 %v142
  %536 = vmatprep.subr.mxu0 0.0
  %537 = vmatpush1.msra.mxu0 %v143
  %538 = vmatprep.subr.mxu0 0.0
  %539 = vmatpush1.msra.mxu0 %v144
  %540 = vmatprep.subr.mxu0 0.0
  %541 = vmatpush1.msra.mxu0 %v145
  %542 = vmatprep.subr.mxu0 0.0
  %543 = vmatpush1.msra.mxu0 %v146
  %544 = vmatprep.subr.mxu0 0.0
  %545 = vmatpush1.msra.mxu0 %v147
  %546 = vmatprep.subr.mxu0 0.0
  %547 = vmatpush1.msra.mxu0 %v148
  %548 = vmatprep.subr.mxu0 0.0
  %549 = vmatpush1.msra.mxu0 %v149
  %550 = vmatprep.subr.mxu0 0.0
  %551 = vmatpush1.msra.mxu0 %v150
  %552 = vmatprep.subr.mxu0 0.0
  %553 = vmatpush1.msra.mxu0 %v151
  %554 = vmatprep.subr.mxu0 0.0
  %555 = vmatpush1.msra.mxu0 %v152
  %556 = vmatprep.subr.mxu0 0.0
  %557 = vmatpush1.msra.mxu0 %v153
  %558 = vmatprep.subr.mxu0 0.0
  %559 = vmatpush1.msra.mxu0 %v154
  %560 = vmatprep.subr.mxu0 0.0
  %561 = vmatpush1.msra.mxu0 %v155
  %562 = vmatprep.subr.mxu0 0.0
  %563 = vmatpush1.msra.mxu0 %v156
  %564 = vmatprep.subr.mxu0 0.0
  %565 = vmatpush1.msra.mxu0 %v157
  %566 = vmatprep.subr.mxu0 0.0
  %567 = vmatpush1.msra.mxu0 %v158
  %568 = vmatprep.subr.mxu0 0.0
  %569 = vmatpush1.msra.mxu0 %v159
  %570 = vmatprep.subr.mxu0 0.0
  %571 = vmatpush1.msra.mxu0 %v160
  %572 = vmatprep.subr.mxu0 0.0
  %573 = vmatpush1.msra.mxu0 %v161
  %574 = vmatprep.subr.mxu0 0.0
  %575 = vmatpush1.msra.mxu0 %v162
  %576 = vmatprep.subr.mxu0 0.0
  %577 = vmatpush1.msra.mxu0 %v163
  %578 = vmatprep.subr.mxu0 0.0
  %579 = vmatpush1.msra.mxu0 %v164
  %580 = vmatprep.subr.mxu0 0.0
  %581 = vmatpush1.msra.mxu0 %v165
  %582 = vmatprep.subr.mxu0 0.0
  %583 = vmatpush1.msra.mxu0 %v166
  %584 = vmatprep.subr.mxu0 0.0
  %585 = vmatpush1.msra.mxu0 %v167
  %586 = vmatprep.subr.mxu0 0.0
  %587 = vmatpush1.msra.mxu0 %v168
  %588 = vmatprep.subr.mxu0 0.0
  %589 = vmatpush1.msra.mxu0 %v169
  %590 = vmatprep.subr.mxu0 0.0
  %591 = vmatpush1.msra.mxu0 %v170
  %592 = vmatprep.subr.mxu0 0.0
  %593 = vmatpush1.msra.mxu0 %v171
  %594 = vmatprep.subr.mxu0 0.0
  %595 = vmatpush1.msra.mxu0 %v172
  %596 = vmatprep.subr.mxu0 0.0
  %597 = vmatpush1.msra.mxu0 %v173
  %598 = vmatprep.mubr.f32.mxu0 %v21
  %599 = vmatmul.mubr.f32.gmra.mrb[0].mxu0 %v20
  %v600 = vpop.f32.mrb[0].mxu0
  %v601 = vadd.f32 %v526, %v600
  %v602 = vpop.f32.mrb[0].mxu0
  %603 = vmatprep.mubr.f32.mxu0 %v37
  %604 = vmatmul.mubr.f32.gmra.mrb[0].mxu0 %v36
  %v605 = vpop.f32.mrb[0].mxu0
  %v606 = vadd.f32 %v531, %v605
  %v607 = vpop.f32.mrb[0].mxu0
  %608 = vdwg.mxu0
  %609 = vmatprep.subr.mxu0 0.0
  %610 = vmatpush1.msra.mxu0 %v174
  %611 = vmatprep.subr.mxu0 0.0
  %612 = vmatpush1.msra.mxu0 %v175
  %613 = vmatprep.subr.mxu0 0.0
  %614 = vmatpush1.msra.mxu0 %v176
  %615 = vmatprep.subr.mxu0 0.0
  %616 = vmatpush1.msra.mxu0 %v177
  %617 = vmatprep.subr.mxu0 0.0
  %618 = vmatpush1.msra.mxu0 %v178
  %619 = vmatprep.subr.mxu0 0.0
  %620 = vmatpush1.msra.mxu0 %v179
  %621 = vmatprep.subr.mxu0 0.0
  %622 = vmatpush1.msra.mxu0 %v180
  %623 = vmatprep.subr.mxu0 0.0
  %624 = vmatpush1.msra.mxu0 %v181
  %625 = vmatprep.subr.mxu0 0.0
  %626 = vmatpush1.msra.mxu0 %v182
  %627 = vmatprep.subr.mxu0 0.0
  %628 = vmatpush1.msra.mxu0 %v183
  %629 = vmatprep.subr.mxu0 0.0
  %630 = vmatpush1.msra.mxu0 %v184
  %631 = vmatprep.subr.mxu0 0.0
  %632 = vmatpush1.msra.mxu0 %v185
  %633 = vmatprep.subr.mxu0 0.0
  %634 = vmatpush1.msra.mxu0 %v186
  %635 = vmatprep.subr.mxu0 0.0
  %636 = vmatpush1.msra.mxu0 %v187
  %637 = vmatprep.subr.mxu0 0.0
  %638 = vmatpush1.msra.mxu0 %v188
  %639 = vmatprep.subr.mxu0 0.0
  %640 = vmatpush1.msra.mxu0 %v189
  %641 = vmatprep.subr.mxu0 0.0
  %642 = vmatpush1.msra.mxu0 %v190
  %643 = vmatprep.subr.mxu0 0.0
  %644 = vmatpush1.msra.mxu0 %v191
  %645 = vmatprep.subr.mxu0 0.0
  %646 = vmatpush1.msra.mxu0 %v192
  %647 = vmatprep.subr.mxu0 0.0
  %648 = vmatpush1.msra.mxu0 %v193
  %649 = vmatprep.subr.mxu0 0.0
  %650 = vmatpush1.msra.mxu0 %v194
  %651 = vmatprep.subr.mxu0 0.0
  %652 = vmatpush1.msra.mxu0 %v195
  %653 = vmatprep.subr.mxu0 0.0
  %654 = vmatpush1.msra.mxu0 %v196
  %655 = vmatprep.subr.mxu0 0.0
  %656 = vmatpush1.msra.mxu0 %v197
  %657 = vmatprep.subr.mxu0 0.0
  %658 = vmatpush1.msra.mxu0 %v198
  %659 = vmatprep.subr.mxu0 0.0
  %660 = vmatpush1.msra.mxu0 %v199
  %661 = vmatprep.subr.mxu0 0.0
  %662 = vmatpush1.msra.mxu0 %v200
  %663 = vmatprep.subr.mxu0 0.0
  %664 = vmatpush1.msra.mxu0 %v201
  %665 = vmatprep.subr.mxu0 0.0
  %666 = vmatpush1.msra.mxu0 %v202
  %667 = vmatprep.subr.mxu0 0.0
  %668 = vmatpush1.msra.mxu0 %v203
  %669 = vmatprep.subr.mxu0 0.0
  %670 = vmatpush1.msra.mxu0 %v204
  %671 = vmatprep.subr.mxu0 0.0
  %672 = vmatpush1.msra.mxu0 %v205
  %673 = vmatprep.mubr.f32.mxu0 %v23
  %674 = vmatmul.mubr.f32.gmra.mrb[0].mxu0 %v22
  %v675 = vpop.f32.mrb[0].mxu0
  %v676 = vadd.f32 %v601, %v675
  %v677 = vpop.f32.mrb[0].mxu0
  %678 = vmatprep.mubr.f32.mxu0 %v39
  %679 = vmatmul.mubr.f32.gmra.mrb[0].mxu0 %v38
  %v680 = vpop.f32.mrb[0].mxu0
  %v681 = vadd.f32 %v606, %v680
  %v682 = vpop.f32.mrb[0].mxu0
  %683 = vdwg.mxu0
  %684 = vmatprep.subr.mxu0 0.0
  %685 = vmatpush1.msra.mxu0 %v206
  %686 = vmatprep.subr.mxu0 0.0
  %687 = vmatpush1.msra.mxu0 %v207
  %688 = vmatprep.subr.mxu0 0.0
  %689 = vmatpush1.msra.mxu0 %v208
  %690 = vmatprep.subr.mxu0 0.0
  %691 = vmatpush1.msra.mxu0 %v209
  %692 = vmatprep.subr.mxu0 0.0
  %693 = vmatpush1.msra.mxu0 %v210
  %694 = vmatprep.subr.mxu0 0.0
  %695 = vmatpush1.msra.mxu0 %v211
  %696 = vmatprep.subr.mxu0 0.0
  %697 = vmatpush1.msra.mxu0 %v212
  %698 = vmatprep.subr.mxu0 0.0
  %699 = vmatpush1.msra.mxu0 %v213
  %700 = vmatprep.subr.mxu0 0.0
  %701 = vmatpush1.msra.mxu0 %v214
  %702 = vmatprep.subr.mxu0 0.0
  %703 = vmatpush1.msra.mxu0 %v215
  %704 = vmatprep.subr.mxu0 0.0
  %705 = vmatpush1.msra.mxu0 %v216
  %706 = vmatprep.subr.mxu0 0.0
  %707 = vmatpush1.msra.mxu0 %v217
  %708 = vmatprep.subr.mxu0 0.0
  %709 = vmatpush1.msra.mxu0 %v218
  %710 = vmatprep.subr.mxu0 0.0
  %711 = vmatpush1.msra.mxu0 %v219
  %712 = vmatprep.subr.mxu0 0.0
  %713 = vmatpush1.msra.mxu0 %v220
  %714 = vmatprep.subr.mxu0 0.0
  %715 = vmatpush1.msra.mxu0 %v221
  %716 = vmatprep.subr.mxu0 0.0
  %717 = vmatpush1.msra.mxu0 %v222
  %718 = vmatprep.subr.mxu0 0.0
  %719 = vmatpush1.msra.mxu0 %v223
  %720 = vmatprep.subr.mxu0 0.0
  %721 = vmatpush1.msra.mxu0 %v224
  %722 = vmatprep.subr.mxu0 0.0
  %723 = vmatpush1.msra.mxu0 %v225
  %724 = vmatprep.subr.mxu0 0.0
  %725 = vmatpush1.msra.mxu0 %v226
  %726 = vmatprep.subr.mxu0 0.0
  %727 = vmatpush1.msra.mxu0 %v227
  %728 = vmatprep.subr.mxu0 0.0
  %729 = vmatpush1.msra.mxu0 %v228
  %730 = vmatprep.subr.mxu0 0.0
  %731 = vmatpush1.msra.mxu0 %v229
  %732 = vmatprep.subr.mxu0 0.0
  %733 = vmatpush1.msra.mxu0 %v230
  %734 = vmatprep.subr.mxu0 0.0
  %735 = vmatpush1.msra.mxu0 %v231
  %736 = vmatprep.subr.mxu0 0.0
  %737 = vmatpush1.msra.mxu0 %v232
  %738 = vmatprep.subr.mxu0 0.0
  %739 = vmatpush1.msra.mxu0 %v233
  %740 = vmatprep.subr.mxu0 0.0
  %741 = vmatpush1.msra.mxu0 %v234
  %742 = vmatprep.subr.mxu0 0.0
  %743 = vmatpush1.msra.mxu0 %v235
  %744 = vmatprep.subr.mxu0 0.0
  %745 = vmatpush1.msra.mxu0 %v236
  %746 = vmatprep.subr.mxu0 0.0
  %747 = vmatpush1.msra.mxu0 %v237
  %748 = vmatprep.mubr.f32.mxu0 %v25
  %749 = vmatmul.mubr.f32.gmra.mrb[0].mxu0 %v24
  %v750 = vpop.f32.mrb[0].mxu0
  %v751 = vadd.f32 %v676, %v750
  %v752 = vpop.f32.mrb[0].mxu0
  %753 = vmatprep.mubr.f32.mxu0 %v41
  %754 = vmatmul.mubr.f32.gmra.mrb[0].mxu0 %v40
  %v755 = vpop.f32.mrb[0].mxu0
  %v756 = vadd.f32 %v681, %v755
  %v757 = vpop.f32.mrb[0].mxu0
  %758 = vdwg.mxu0
  %759 = vmatprep.subr.mxu0 0.0
  %760 = vmatpush1.msra.mxu0 %v238
  %761 = vmatprep.subr.mxu0 0.0
  %762 = vmatpush1.msra.mxu0 %v239
  %763 = vmatprep.subr.mxu0 0.0
  %764 = vmatpush1.msra.mxu0 %v240
  %765 = vmatprep.subr.mxu0 0.0
  %766 = vmatpush1.msra.mxu0 %v241
  %767 = vmatprep.subr.mxu0 0.0
  %768 = vmatpush1.msra.mxu0 %v242
  %769 = vmatprep.subr.mxu0 0.0
  %770 = vmatpush1.msra.mxu0 %v243
  %771 = vmatprep.subr.mxu0 0.0
  %772 = vmatpush1.msra.mxu0 %v244
  %773 = vmatprep.subr.mxu0 0.0
  %774 = vmatpush1.msra.mxu0 %v245
  %775 = vmatprep.subr.mxu0 0.0
  %776 = vmatpush1.msra.mxu0 %v246
  %777 = vmatprep.subr.mxu0 0.0
  %778 = vmatpush1.msra.mxu0 %v247
  %779 = vmatprep.subr.mxu0 0.0
  %780 = vmatpush1.msra.mxu0 %v248
  %781 = vmatprep.subr.mxu0 0.0
  %782 = vmatpush1.msra.mxu0 %v249
  %783 = vmatprep.subr.mxu0 0.0
  %784 = vmatpush1.msra.mxu0 %v250
  %785 = vmatprep.subr.mxu0 0.0
  %786 = vmatpush1.msra.mxu0 %v251
  %787 = vmatprep.subr.mxu0 0.0
  %788 = vmatpush1.msra.mxu0 %v252
  %789 = vmatprep.subr.mxu0 0.0
  %790 = vmatpush1.msra.mxu0 %v253
  %791 = vmatprep.subr.mxu0 0.0
  %792 = vmatpush1.msra.mxu0 %v254
  %793 = vmatprep.subr.mxu0 0.0
  %794 = vmatpush1.msra.mxu0 %v255
  %795 = vmatprep.subr.mxu0 0.0
  %796 = vmatpush1.msra.mxu0 %v256
  %797 = vmatprep.subr.mxu0 0.0
  %798 = vmatpush1.msra.mxu0 %v257
  %799 = vmatprep.subr.mxu0 0.0
  %800 = vmatpush1.msra.mxu0 %v258
  %801 = vmatprep.subr.mxu0 0.0
  %802 = vmatpush1.msra.mxu0 %v259
  %803 = vmatprep.subr.mxu0 0.0
  %804 = vmatpush1.msra.mxu0 %v260
  %805 = vmatprep.subr.mxu0 0.0
  %806 = vmatpush1.msra.mxu0 %v261
  %807 = vmatprep.subr.mxu0 0.0
  %808 = vmatpush1.msra.mxu0 %v262
  %809 = vmatprep.subr.mxu0 0.0
  %810 = vmatpush1.msra.mxu0 %v263
  %811 = vmatprep.subr.mxu0 0.0
  %812 = vmatpush1.msra.mxu0 %v264
  %813 = vmatprep.subr.mxu0 0.0
  %814 = vmatpush1.msra.mxu0 %v265
  %815 = vmatprep.subr.mxu0 0.0
  %816 = vmatpush1.msra.mxu0 %v266
  %817 = vmatprep.subr.mxu0 0.0
  %818 = vmatpush1.msra.mxu0 %v267
  %819 = vmatprep.subr.mxu0 0.0
  %820 = vmatpush1.msra.mxu0 %v268
  %821 = vmatprep.subr.mxu0 0.0
  %822 = vmatpush1.msra.mxu0 %v269
  %823 = vmatprep.mubr.f32.mxu0 %v27
  %824 = vmatmul.mubr.f32.gmra.mrb[0].mxu0 %v26
  %v825 = vpop.f32.mrb[0].mxu0
  %v826 = vadd.f32 %v751, %v825
  %v827 = vpop.f32.mrb[0].mxu0
  %828 = vmatprep.mubr.f32.mxu0 %v43
  %829 = vmatmul.mubr.f32.gmra.mrb[0].mxu0 %v42
  %v830 = vpop.f32.mrb[0].mxu0
  %v831 = vadd.f32 %v756, %v830
  %v832 = vpop.f32.mrb[0].mxu0
  %833 = vdwg.mxu0
  %834 = vmatprep.subr.mxu0 0.0
  %835 = vmatpush1.msra.mxu0 %v270
  %836 = vmatprep.subr.mxu0 0.0
  %837 = vmatpush1.msra.mxu0 %v271
  %838 = vmatprep.subr.mxu0 0.0
  %839 = vmatpush1.msra.mxu0 %v272
  %840 = vmatprep.subr.mxu0 0.0
  %841 = vmatpush1.msra.mxu0 %v273
  %842 = vmatprep.subr.mxu0 0.0
  %843 = vmatpush1.msra.mxu0 %v274
  %844 = vmatprep.subr.mxu0 0.0
  %845 = vmatpush1.msra.mxu0 %v275
  %846 = vmatprep.subr.mxu0 0.0
  %847 = vmatpush1.msra.mxu0 %v276
  %848 = vmatprep.subr.mxu0 0.0
  %849 = vmatpush1.msra.mxu0 %v277
  %850 = vmatprep.subr.mxu0 0.0
  %851 = vmatpush1.msra.mxu0 %v278
  %852 = vmatprep.subr.mxu0 0.0
  %853 = vmatpush1.msra.mxu0 %v279
  %854 = vmatprep.subr.mxu0 0.0
  %855 = vmatpush1.msra.mxu0 %v280
  %856 = vmatprep.subr.mxu0 0.0
  %857 = vmatpush1.msra.mxu0 %v281
  %858 = vmatprep.subr.mxu0 0.0
  %859 = vmatpush1.msra.mxu0 %v282
  %860 = vmatprep.subr.mxu0 0.0
  %861 = vmatpush1.msra.mxu0 %v283
  %862 = vmatprep.subr.mxu0 0.0
  %863 = vmatpush1.msra.mxu0 %v284
  %864 = vmatprep.subr.mxu0 0.0
  %865 = vmatpush1.msra.mxu0 %v285
  %866 = vmatprep.subr.mxu0 0.0
  %867 = vmatpush1.msra.mxu0 %v286
  %868 = vmatprep.subr.mxu0 0.0
  %869 = vmatpush1.msra.mxu0 %v287
  %870 = vmatprep.subr.mxu0 0.0
  %871 = vmatpush1.msra.mxu0 %v288
  %872 = vmatprep.subr.mxu0 0.0
  %873 = vmatpush1.msra.mxu0 %v289
  %874 = vmatprep.subr.mxu0 0.0
  %875 = vmatpush1.msra.mxu0 %v290
  %876 = vmatprep.subr.mxu0 0.0
  %877 = vmatpush1.msra.mxu0 %v291
  %878 = vmatprep.subr.mxu0 0.0
  %879 = vmatpush1.msra.mxu0 %v292
  %880 = vmatprep.subr.mxu0 0.0
  %881 = vmatpush1.msra.mxu0 %v293
  %882 = vmatprep.subr.mxu0 0.0
  %883 = vmatpush1.msra.mxu0 %v294
  %884 = vmatprep.subr.mxu0 0.0
  %885 = vmatpush1.msra.mxu0 %v295
  %886 = vmatprep.subr.mxu0 0.0
  %887 = vmatpush1.msra.mxu0 %v296
  %888 = vmatprep.subr.mxu0 0.0
  %889 = vmatpush1.msra.mxu0 %v297
  %890 = vmatprep.subr.mxu0 0.0
  %891 = vmatpush1.msra.mxu0 %v298
  %892 = vmatprep.subr.mxu0 0.0
  %893 = vmatpush1.msra.mxu0 %v299
  %894 = vmatprep.subr.mxu0 0.0
  %895 = vmatpush1.msra.mxu0 %v300
  %896 = vmatprep.subr.mxu0 0.0
  %897 = vmatpush1.msra.mxu0 %v301
  %898 = vmatprep.mubr.f32.mxu0 %v29
  %899 = vmatmul.mubr.f32.gmra.mrb[0].mxu0 %v28
  %v900 = vpop.f32.mrb[0].mxu0
  %v901 = vadd.f32 %v826, %v900
  %v902 = vpop.f32.mrb[0].mxu0
  %903 = vmatprep.mubr.f32.mxu0 %v45
  %904 = vmatmul.mubr.f32.gmra.mrb[0].mxu0 %v44
  %v905 = vpop.f32.mrb[0].mxu0
  %v906 = vadd.f32 %v831, %v905
  %v907 = vpop.f32.mrb[0].mxu0
  %908 = vdwg.mxu0
  %v909 = vmul.f32 %v901, %v901
  %v910 = vmul.f32 %v906, %v906
  %vm911 = vcmask 31744
  %v912 = vsel %vm911, %v909, 0.0
  %913 = vadd.xlane.f32.xlu0 %v912
  %v914 = vpop.xlane.xlu0 %913
  %v915 = vsel %vm911, %v910, 0.0
  %916 = vadd.xlane.f32.xlu0 %v915
  %v917 = vpop.xlane.xlu0 %916
  %v918 = vmax.f32 %v914, 1e-24
  %v919 = vmax.f32 %v917, 1e-24
  %v920 = vrsqrt.pop %v918
  %v921 = vrsqrt.pop %v919
  %v922 = vmul.f32 %v901, %v920
  %v923 = vmul.f32 %v906, %v921
  %924 = vst.msk [vmem:[%s3] sm:$0xff] %vm911, %v922
  %925 = vst.msk [vmem:[%s3 + $0x8] sm:$0xff] %vm911, %v923
  // Predicated region
  $region14: #{orientation_head.1} parent=0 // pred_check
    _
  $region15: #{orientation_head.1} parent=0 // pred_check_branch
    %927 = sbr.rel (0) target = $region17
  $region16: #{orientation_head.1} parent=0 // pred_region
    _
  $region17: #{orientation_head.1} parent=0 // pred_fallthru
    _
  // Predicated region
  $region18: #{orientation_head.1} parent=0 // pred_check
    _
  $region19: #{orientation_head.1} parent=0 // pred_check_branch
    %929 = sbr.rel (0) target = $region21
  $region20: #{orientation_head.1} parent=0 // pred_region
    _
  $region21: #{orientation_head.1} parent=0 // pred_fallthru
    _

</llo_original>
